<compile_context>
chip_gen: v7x
topology: tpu7x:2x2x1
jax: 0.10.0
libtpu: 0.0.40
codegen_flags: <defaults>
</compile_context>

<pallas_src>
import functools

import jax
import jax.numpy as jnp
from jax import lax
from jax.experimental import pallas as pl
from jax.experimental.pallas import tpu as pltpu


def _prng_noise_kernel(seed_ref, x_ref, o_ref, *, std):
    """y = x + N(0,1)*std, noise drawn on-core with the HW PRNG."""
    # Mix the grid position into the seed so every tile draws a distinct stream.
    pltpu.prng_seed(seed_ref[0], pl.program_id(0))
    # TODO(synk): on v7x (~3.2 TB/s HBM) stateful_normal may flip this kernel
    # from DMA-bound to EUP-bound; if the bundle dump shows the EUP saturating,
    # draw bf16 noise or use stateful_bits + a cheaper Gaussian transform.
    noise = pltpu.stateful_normal(x_ref.shape, jnp.float32)
    x = x_ref[...].astype(jnp.float32)
    o_ref[...] = (x + noise * jnp.float32(std)).astype(o_ref.dtype)


def _add_noise_kernel(x_ref, n_ref, o_ref, *, std):
    """y = x + noise*std with precomputed noise (portable non-TPU fallback)."""
    x = x_ref[...].astype(jnp.float32)
    noise = n_ref[...].astype(jnp.float32)
    o_ref[...] = (x + noise * jnp.float32(std)).astype(o_ref.dtype)


_LANE_CANDIDATES = (2048, 1024, 512, 384, 256, 128)


def _choose_lane(n):
    """Pick the lane (last-dim) width for the flattened [rows, lane] slab.

    First preference: the widest multiple of 128 that divides n exactly, so
    the kernel covers the whole tensor and no ragged tail (and none of the
    extra HBM copies it implies) is needed.  Fallback: the widest lane giving
    at least 8 rows; a tiny tail is then handled in jnp.
    """
    for lane in _LANE_CANDIDATES:
        if n % lane == 0 and n // lane >= 1:
            return lane
    for lane in _LANE_CANDIDATES:
        if n // lane >= 8:
            return lane
    return 128


# ~4 MiB per ref per pipeline buffer (measured f32-add tile sweep: ~86-90% of
# HBM roofline vs ~85% at 1 MiB; amortizes the ~0.35us per-grid-step overhead
# plus the per-tile prng_seed over 4x fewer steps).  Double-buffered working
# set is 2 refs x 2 buffers x 4 MiB = 16 MiB, so explicitly raise the scoped
# VMEM limit to 32 MiB: above v5e's 16 MiB default, far below v7x's 64 MiB
# physical VMEM and v5e/v6e's 128 MiB.
_TARGET_BLOCK_BYTES = 4 * 1024 * 1024
_VMEM_LIMIT_BYTES = 32 * 1024 * 1024


def feature_noising(x, seed, *, std=0.1, training=True):
    """JAX/Pallas equivalent of FeatureNoising.forward."""
    if not training:
        return x

    orig_shape = x.shape
    dtype = x.dtype
    flat = x.reshape(-1)
    n = flat.shape[0]
    itemsize = jnp.dtype(dtype).itemsize

    key = jax.random.PRNGKey(seed)
    main_key, tail_key = jax.random.split(key)

    lane = _choose_lane(n)
    rows = n // lane
    n_main = rows * lane
    n_tail = n - n_main

    if rows == 0:
        # Too small for a kernel launch: pure jnp.
        noise = jax.random.normal(main_key, flat.shape, jnp.float32)
        return (flat.astype(jnp.float32) + noise * std).astype(dtype).reshape(orig_shape)

    # Dtype-aware row tiling from a byte budget; tile_rows is a multiple of 8
    # (or the full extent), keeping the (8, 128) block constraint satisfied.
    max_tile_rows = max(8, (_TARGET_BLOCK_BYTES // (lane * itemsize)) // 8 * 8)
    tile_rows = rows if rows <= max_tile_rows else max_tile_rows
    num_blocks = pl.cdiv(rows, tile_rows)

    # In the common (divisible) case this reshape is a view of the whole
    # tensor; only the rare ragged case slices a prefix.
    x2d = flat.reshape(rows, lane) if n_tail == 0 else flat[:n_main].reshape(rows, lane)

    compiler_params = pltpu.CompilerParams(
        # TODO(synk): on v7x, verify both TensorCores stream with a single
        # "parallel" axis; if not, add a leading grid axis of size 2 with
        # pltpu.CORE_PARALLEL and split rows across cores.
        dimension_semantics=("parallel",),
        vmem_limit_bytes=_VMEM_LIMIT_BYTES,
    )

    use_hw_prng = jax.default_backend() == "tpu"

    if use_hw_prng:
        # In-kernel HW PRNG: only x in / y out cross HBM (2 passes total).
        seed_arr = jnp.asarray([seed], dtype=jnp.int32)
        kernel = functools.partial(_prng_noise_kernel, std=float(std))
        out2d = pl.pallas_call(
            kernel,
            out_shape=jax.ShapeDtypeStruct((rows, lane), dtype),
            grid_spec=pltpu.PrefetchScalarGridSpec(
                num_scalar_prefetch=1,
                grid=(num_blocks,),
                in_specs=[pl.BlockSpec((tile_rows, lane), lambda i, seed_ref: (i, 0))],
                out_specs=pl.BlockSpec((tile_rows, lane), lambda i, seed_ref: (i, 0)),
            ),
            compiler_params=compiler_params,
            cost_estimate=pl.CostEstimate(
                flops=2 * n_main,
                transcendentals=3 * n_main,
                bytes_accessed=2 * n_main * itemsize,
            ),
        )(seed_arr, x2d)
    else:
        # Portable fallback (interpret / non-TPU backends where pltpu.prng_*
        # does not lower): precompute noise with jax.random, fuse the add.
        noise2d = jax.random.normal(main_key, (rows, lane), dtype=jnp.float32)
        kernel = functools.partial(_add_noise_kernel, std=float(std))
        out2d = pl.pallas_call(
            kernel,
            out_shape=jax.ShapeDtypeStruct((rows, lane), dtype),
            grid=(num_blocks,),
            in_specs=[
                pl.BlockSpec((tile_rows, lane), lambda i: (i, 0)),
                pl.BlockSpec((tile_rows, lane), lambda i: (i, 0)),
            ],
            out_specs=pl.BlockSpec((tile_rows, lane), lambda i: (i, 0)),
            compiler_params=compiler_params,
            cost_estimate=pl.CostEstimate(
                flops=2 * n_main,
                transcendentals=0,
                bytes_accessed=(2 * itemsize + 4) * n_main,
            ),
        )(x2d, noise2d)

    if n_tail == 0:
        return out2d.reshape(orig_shape)

    # Rare ragged tail (< lane elements): jnp for the tail, combined with
    # dynamic_update_slice (XLA can do these in place) rather than concatenate.
    tail = flat[n_main:].astype(jnp.float32)
    tail_noise = jax.random.normal(tail_key, (n_tail,), jnp.float32)
    out_tail = (tail + tail_noise * std).astype(dtype)
    out_flat = lax.dynamic_update_slice(flat, out2d.reshape(-1), (0,))
    out_flat = lax.dynamic_update_slice(out_flat, out_tail, (n_main,))
    return out_flat.reshape(orig_shape)


if __name__ == "__main__":
    key = jax.random.PRNGKey(0)
    # NCHW input, matching the PyTorch convention.
    x = jax.random.normal(key, (2, 4, 16, 16), dtype=jnp.float32)

    std = 0.1

    # Training mode: x + N(0, std^2) noise.
    y_train = feature_noising(x, seed=42, std=std, training=True)
    y_train = jax.block_until_ready(y_train)
    assert y_train.shape == x.shape and y_train.dtype == x.dtype

    # The added noise should be zero-mean with std ~= 0.1 (loose statistical check).
    noise = y_train - x
    assert float(jnp.abs(jnp.mean(noise))) < 0.05
    assert 0.05 < float(jnp.std(noise)) < 0.2

    # Eval mode: identity.
    y_eval = feature_noising(x, seed=42, std=std, training=False)
    y_eval = jax.block_until_ready(y_eval)
    assert bool(jnp.all(y_eval == x))

    print("KERNEL_OK")
</pallas_src>

<mosaic_0001>
module attributes {stable_mosaic.version = 11 : i64} {
  func.func @_add_noise_kernel(%arg0: i32, %arg1: memref<1x2048xf32, #tpu.memory_space<vmem>>, %arg2: memref<1x2048xf32, #tpu.memory_space<vmem>>, %arg3: memref<1x2048xf32, #tpu.memory_space<vmem>>) attributes {dimension_semantics = [#tpu.dimension_semantics<parallel>], iteration_bounds = array<i64: 1>, scalar_prefetch = 0 : i64, scratch_operands = 0 : i64, tpu.core_type = #tpu.core_type<tc>, window_params = [{transform_indices = @transform_0, window_bounds = array<i64: 1, 2048>}, {transform_indices = @transform_1, window_bounds = array<i64: 1, 2048>}, {transform_indices = @transform_2, window_bounds = array<i64: 1, 2048>}]} {
    %c0 = arith.constant 0 : index
    %c0_0 = arith.constant 0 : index
    %0 = vector.load %arg1[%c0, %c0_0] : memref<1x2048xf32, #tpu.memory_space<vmem>>, vector<1x2048xf32>
    %c0_1 = arith.constant 0 : index
    %c0_2 = arith.constant 0 : index
    %1 = vector.load %arg2[%c0_1, %c0_2] : memref<1x2048xf32, #tpu.memory_space<vmem>>, vector<1x2048xf32>
    %cst = arith.constant 1.000000e-01 : f32
    %2 = vector.broadcast %cst : f32 to vector<1x2048xf32>
    %3 = arith.mulf %1, %2 : vector<1x2048xf32>
    %4 = arith.addf %0, %3 : vector<1x2048xf32>
    %c0_3 = arith.constant 0 : index
    %c0_4 = arith.constant 0 : index
    %5 = vector.load %arg3[%c0_3, %c0_4] : memref<1x2048xf32, #tpu.memory_space<vmem>>, vector<1x2048xf32>
    tpu.vector_store %arg3[%c0_3, %c0_4], %4 {strides = array<i32>} : memref<1x2048xf32, #tpu.memory_space<vmem>>, vector<1x2048xf32>,
    return
  }
  func.func @transform_0(%arg0: i32) -> (i32, i32) {
    %c0_i32 = arith.constant 0 : i32
    %c0_i32_0 = arith.constant 0 : i32
    return %arg0, %c0_i32 : i32, i32
  }
  func.func @transform_1(%arg0: i32) -> (i32, i32) {
    %c0_i32 = arith.constant 0 : i32
    %c0_i32_0 = arith.constant 0 : i32
    return %arg0, %c0_i32 : i32, i32
  }
  func.func @transform_2(%arg0: i32) -> (i32, i32) {
    %c0_i32 = arith.constant 0 : i32
    %c0_i32_0 = arith.constant 0 : i32
    return %arg0, %c0_i32 : i32, i32
  }
}

</mosaic_0001>

<llo_original>
// kernel: tpu_custom_call.1
$region0: #{tpu_custom_call.1}
  #allocation0 [shape = 'u32[]', space=smem, size = 0x4, offset = 0x4, fixed_abs, tag = 'smem constant byte address 0x4 - core index']
  #allocation1 [shape = 'u32[144,128]{1,0:T(1,128)}', space=vmem, size = 0x12000, scoped, tag = 'internal scratch']
  %s0 = inlined_call_operand.hbm [shape: f32[1,2048], index: 0, kind: input, shape index: {}]
  %s1 = inlined_call_operand.hbm [shape: f32[1,2048], index: 1, kind: input, shape index: {}]
  %s2 = inlined_call_operand.hbm [shape: f32[1,2048], index: 2, kind: output, shape index: {}]
  %s3 = sld [smem:[#allocation0]]
  $region26: #{tpu_custom_call.1} parent=0
    _
  %s5 = ssub.s32 1, %s3
  %s6 = scalar_select 0, %s5, %s3
  $region1: #{tpu_custom_call.1} parent=0
    #allocation2 [shape = 'u8[8192]{0}', space=vmem, size = 0x2000, scoped, tag = 'input window, operand 0, single buffered']
    #allocation3 [shape = 's32[1]{0}', space=sflag, size = 0x4, scoped, tag = 'scoped memory for tpu_custom_call.1']
    #allocation4 [shape = 's32[1]{0}', space=sflag, size = 0x4, scoped, tag = 'scoped memory for tpu_custom_call.1']
    #allocation5 [shape = 'u8[8192]{0}', space=vmem, size = 0x2000, scoped, tag = 'input window, operand 1, single buffered']
    #allocation6 [shape = 's32[1]{0}', space=sflag, size = 0x4, scoped, tag = 'scoped memory for tpu_custom_call.1']
    #allocation7 [shape = 'u8[8192]{0}', space=vmem, size = 0x2000, scoped, tag = 'output window, operand 0, single buffered']
    %7 = vsyncpa [#allocation3], 0
    %8 = vsyncpa [#allocation6], 0
    %9 = vsyncpa [#allocation4], 0
    // Predicated region
    $region2: #{tpu_custom_call.1} parent=1 // pred_check
      _
    $region3: #{tpu_custom_call.1} parent=1 // pred_check_branch
      %11 = sbr.rel (0) target = $region5
    $region4: #{tpu_custom_call.1} parent=1 // pred_region
      %s13 = ssub.s32 256, 256
      %14 = vsyncadd [#allocation3], %s13
      %s16 = sshll.u32 [#allocation2], 4
      %s17 = int_to_ptr.vmem [resolvable:$true] %s16
      %19 = dma.hbm_to_vmem [thread:$0]  %s0, 256, %s17, [#allocation3]
    $region5: #{tpu_custom_call.1} parent=1 // pred_fallthru
      _
    // Predicated region
    $region6: #{tpu_custom_call.1} parent=1 // pred_check
      _
    $region7: #{tpu_custom_call.1} parent=1 // pred_check_branch
      %21 = sbr.rel (0) target = $region9
    $region8: #{tpu_custom_call.1} parent=1 // pred_region
      %s23 = ssub.s32 256, 256
      %24 = vsyncadd [#allocation6], %s23
      %s26 = sshll.u32 [#allocation5], 4
      %s27 = int_to_ptr.vmem [resolvable:$true] %s26
      %29 = dma.hbm_to_vmem [thread:$0]  %s1, 256, %s27, [#allocation6]
    $region9: #{tpu_custom_call.1} parent=1 // pred_fallthru
      _
    // Predicated region
    $region10: #{tpu_custom_call.1} parent=1 // pred_check
      _
    $region11: #{tpu_custom_call.1} parent=1 // pred_check_branch
      %31 = sbr.rel (0) target = $region13
    $region12: #{tpu_custom_call.1} parent=1 // pred_region
      %32 = dma.done [#allocation3], 256
    $region13: #{tpu_custom_call.1} parent=1 // pred_fallthru
      _
    // Predicated region
    $region14: #{tpu_custom_call.1} parent=1 // pred_check
      _
    $region15: #{tpu_custom_call.1} parent=1 // pred_check_branch
      %34 = sbr.rel (0) target = $region17
    $region16: #{tpu_custom_call.1} parent=1 // pred_region
      %35 = dma.done [#allocation6], 256
    $region17: #{tpu_custom_call.1} parent=1 // pred_fallthru
      _
    %v36 = vld [vmem:[#allocation2] sm:$0xff]
    %v37 = vld [vmem:[#allocation2 + $0x8] sm:$0xff]
    %v38 = vld [vmem:[#allocation5] sm:$0xff]
    %v39 = vld [vmem:[#allocation5 + $0x8] sm:$0xff]
    %v40 = vmul.f32 %v38, 0.1
    %v41 = vmul.f32 %v39, 0.1
    %v42 = vadd.f32 %v36, %v40
    %v43 = vadd.f32 %v37, %v41
    %44 = vst [vmem:[#allocation7] sm:$0xff] %v42
    %45 = vst [vmem:[#allocation7 + $0x8] sm:$0xff] %v43
    // Predicated region
    $region18: #{tpu_custom_call.1} parent=1 // pred_check
      _
    $region19: #{tpu_custom_call.1} parent=1 // pred_check_branch
      %47 = sbr.rel (0) target = $region21
    $region20: #{tpu_custom_call.1} parent=1 // pred_region
      %s49 = ssub.s32 256, 256
      %50 = vsyncadd [#allocation4], %s49
      %s52 = sshll.u32 [#allocation7], 4
      %s53 = int_to_ptr.vmem [resolvable:$true] %s52
      %55 = dma.vmem_to_hbm [thread:$0]  %s53, 256, %s2, [#allocation4]
    $region21: #{tpu_custom_call.1} parent=1 // pred_fallthru
      _
    // Predicated region
    $region22: #{tpu_custom_call.1} parent=1 // pred_check
      _
    $region23: #{tpu_custom_call.1} parent=1 // pred_check_branch
      %57 = sbr.rel (0) target = $region25
    $region24: #{tpu_custom_call.1} parent=1 // pred_region
      %58 = dma.done [#allocation4], 256
    $region25: #{tpu_custom_call.1} parent=1 // pred_fallthru
      _
    %59 = vsyncpa [#allocation3], 1
    %60 = vsyncpa [#allocation6], 1
    %61 = vsyncpa [#allocation4], 1

</llo_original>
